<compile_context>
chip_gen: v7x
topology: tpu7x:2x2x1
jax: 0.10.0
libtpu: 0.0.40
codegen_flags: <defaults>
</compile_context>

<pallas_src>
import functools

import jax
import jax.numpy as jnp
from jax.experimental import pallas as pl
from jax.experimental.pallas import tpu as pltpu


def _generator_kernel(x_ref, t_ref, y_ref,
                      w1x_ref, w1t_ref, w1y_ref, b1_ref,
                      w2_ref, b2_ref,
                      w3_ref, b3_ref,
                      w4r_ref, b4_ref,
                      out_ref, *, h_dim):
    """One batch-tile of the Generator MLP.

    h1  = relu(x @ W1x + t * w1t + y * w1y + b1)        (== relu(cat(x,t,y) @ W1 + b1))
    h2  = relu(h1 @ W2 + b2)
    h3  = relu(h2 @ [W31 | W41] + [b31 | b41])           (= [h31 | h41])
    out = [sum(h31 * w32), sum(h41 * w42)] + [b32 | b42]  (VPU/XLU, not MXU)
    """
    # ---- Layer 1: MXU matmul on the x columns (bf16 operands, f32 acc); the
    # t / y columns of W1 are folded in as rank-1 VPU updates, which is what
    # lets the wrapper skip the [x, t, y] concat materialization entirely.
    x_bf = x_ref[...].astype(jnp.bfloat16)
    h1 = jnp.dot(x_bf, w1x_ref[...], preferred_element_type=jnp.float32)
    h1 = h1 + t_ref[...] * w1t_ref[...] + y_ref[...] * w1y_ref[...] + b1_ref[...]
    h1 = jnp.maximum(h1, 0.0)

    # ---- Layer 2 (bf16 operands, f32 accumulate, f32 bias/ReLU).
    h2 = jnp.dot(h1.astype(jnp.bfloat16), w2_ref[...],
                 preferred_element_type=jnp.float32) + b2_ref[...]
    h2 = jnp.maximum(h2, 0.0)

    # ---- Layer 3, both potential-outcome branches fused along the lane axis.
    h3 = jnp.dot(h2.astype(jnp.bfloat16), w3_ref[...],
                 preferred_element_type=jnp.float32) + b3_ref[...]
    h3 = jnp.maximum(h3, 0.0)                      # (block_m, 2*h_dim) f32

    # ---- Layer 4 (h_dim -> 1 per branch) on the VPU + XLU instead of a
    # lane-padded N=2 MXU matmul; no block-diagonal zero padding needed.
    prod = h3 * w4r_ref[...]                       # (block_m, 2*h_dim) f32
    logit0 = jnp.sum(prod[:, :h_dim], axis=-1, keepdims=True)
    logit1 = jnp.sum(prod[:, h_dim:], axis=-1, keepdims=True)
    out = jnp.concatenate([logit0, logit1], axis=1) + b4_ref[...]

    out_ref[...] = out.astype(out_ref.dtype)


def _round_up(x, m):
    return ((x + m - 1) // m) * m


def _num_tensorcores():
    """Best-effort TensorCore count per chip (v7x has 2, earlier gens 1)."""
    try:
        kind = jax.devices()[0].device_kind.lower()
    except Exception:
        return 1
    return 2 if ("v7" in kind or "7x" in kind) else 1


_SINGLE_CORE_CAP = 2048   # v5e / v6e: one TC -> serial grid, use big tiles
_DUAL_CORE_CAP = 1024     # v7x: 2 TCs, half the physical VMEM of v6e


def _choose_block_m(n, num_cores):
    """Batch-tile size (multiple of 8 sublanes)."""
    if num_cores >= 2 and n > 16:
        # v7x: an even number (>= 2) of equal "parallel" tiles so both
        # TensorCores get balanced work.
        tiles = max(2, pl.cdiv(n, _DUAL_CORE_CAP))
        if tiles % 2:
            tiles += 1
        return _round_up(pl.cdiv(n, tiles), 8)
    # Single TensorCore: the grid is a serial loop; as few tiles as possible.
    return min(_SINGLE_CORE_CAP, _round_up(max(n, 8), 8))


def generator_forward(params, x, t, y, *, block_m=None):
    """Runs the Generator forward pass with a Pallas TPU kernel.

    params: dict of (W, b) pairs, W stored as [in, out] float32, b as [1, out].
    x: [N, input_dim], t: [N, 1], y: [N, 1]  (float32)
    returns: [N, 2] float32
    """
    n, input_dim = x.shape

    num_cores = _num_tensorcores()
    if block_m is None:
        block_m = _choose_block_m(n, num_cores)
    block_m = _round_up(block_m, 8)

    # Pad the batch to a tile multiple (only copy left in the wrapper; padded
    # rows are zero, compute finite garbage, and are sliced off at the end).
    n_pad = pl.cdiv(n, block_m) * block_m
    if n_pad != n:
        pad = ((0, n_pad - n), (0, 0))
        x = jnp.pad(x, pad)
        t = jnp.pad(t, pad)
        y = jnp.pad(y, pad)

    (w1, b1) = params["fc1"]
    (w2, b2) = params["fc2"]
    (w31, b31) = params["fc31"]
    (w32, b32) = params["fc32"]
    (w41, b41) = params["fc41"]
    (w42, b42) = params["fc42"]
    h_dim = w2.shape[0]

    # Split W1: x columns go to the MXU, the t / y columns become rank-1 VPU
    # updates inside the kernel (no wrapper-side concat of [x, t, y]).
    w1x = w1[:input_dim]                                  # (input_dim, h)
    w1t = w1[input_dim:input_dim + 1]                     # (1, h)
    w1y = w1[input_dim + 1:input_dim + 2]                 # (1, h)

    # Fuse the two potential-outcome branches of layer 3 along the lane axis.
    w3 = jnp.concatenate([w31, w41], axis=1)              # (h, 2h)
    b3 = jnp.concatenate([b31, b41], axis=1)              # (1, 2h)
    # Layer-4 weights as a single fused row (used on the VPU, not the MXU).
    w4r = jnp.concatenate([w32.T, w42.T], axis=1)         # (1, 2h)
    b4 = jnp.concatenate([b32, b42], axis=1)              # (1, 2)

    # bf16 MXU operands (weights cast once here; activations cast in-kernel).
    w1x_bf = w1x.astype(jnp.bfloat16)
    w2_bf = w2.astype(jnp.bfloat16)
    w3_bf = w3.astype(jnp.bfloat16)

    grid = (n_pad // block_m,)

    # Weights/biases: full-array blocks with a constant block index -> stay
    # VMEM-resident across the whole grid.
    def _rep(arr):
        return pl.BlockSpec(arr.shape, lambda i: (0, 0))

    in_specs = [
        pl.BlockSpec((block_m, input_dim), lambda i: (i, 0)),   # x tile
        pl.BlockSpec((block_m, 1), lambda i: (i, 0)),           # t tile
        pl.BlockSpec((block_m, 1), lambda i: (i, 0)),           # y tile
        _rep(w1x_bf), _rep(w1t), _rep(w1y), _rep(b1),
        _rep(w2_bf), _rep(b2),
        _rep(w3_bf), _rep(b3),
        _rep(w4r), _rep(b4),
    ]
    out_spec = pl.BlockSpec((block_m, 2), lambda i: (i, 0))

    kernel = functools.partial(_generator_kernel, h_dim=h_dim)

    out = pl.pallas_call(
        kernel,
        out_shape=jax.ShapeDtypeStruct((n_pad, 2), jnp.float32),
        grid_spec=pltpu.PrefetchScalarGridSpec(
            num_scalar_prefetch=0,
            grid=grid,
            in_specs=in_specs,
            out_specs=out_spec,
        ),
        compiler_params=pltpu.CompilerParams(
            dimension_semantics=("parallel",)),
    )(x, t, y,
      w1x_bf, w1t, w1y, b1,
      w2_bf, b2,
      w3_bf, b3,
      w4r, b4)

    return out[:n]


def init_generator_params(key, input_dim, h_dim):
    """Deterministic xavier-normal init matching the PyTorch module.

    PyTorch Linear.weight is [out, in]; xavier_normal_ std = sqrt(2/(fan_in+fan_out)).
    We store the transpose [in, out] for direct x @ W. Biases are zero.
    """
    dims = {
        "fc1": (input_dim + 2, h_dim),
        "fc2": (h_dim, h_dim),
        "fc31": (h_dim, h_dim),
        "fc32": (h_dim, 1),
        "fc41": (h_dim, h_dim),
        "fc42": (h_dim, 1),
    }
    params = {}
    for name, (fan_in, fan_out) in dims.items():
        key, sub = jax.random.split(key)
        std = (2.0 / (fan_in + fan_out)) ** 0.5
        w = std * jax.random.normal(sub, (fan_in, fan_out), dtype=jnp.float32)
        b = jnp.zeros((1, fan_out), dtype=jnp.float32)
        params[name] = (w, b)
    return params


def generator_reference(params, x, t, y):
    """Pure-JAX f32 reference (unfused branches, exactly the PyTorch graph)."""
    inputs = jnp.concatenate([x, t, y], axis=1)
    (w1, b1) = params["fc1"]
    (w2, b2) = params["fc2"]
    (w31, b31) = params["fc31"]
    (w32, b32) = params["fc32"]
    (w41, b41) = params["fc41"]
    (w42, b42) = params["fc42"]
    h1 = jax.nn.relu(inputs @ w1 + b1)
    h2 = jax.nn.relu(h1 @ w2 + b2)
    h31 = jax.nn.relu(h2 @ w31 + b31)
    logit0 = h31 @ w32 + b32
    h41 = jax.nn.relu(h2 @ w41 + b41)
    logit1 = h41 @ w42 + b42
    return jnp.concatenate([logit0, logit1], axis=1)


if __name__ == "__main__":
    key = jax.random.PRNGKey(0)
    batch = 50          # deliberately not a multiple of the tile -> exercises padding
    input_dim = 30
    h_dim = 32

    k_params, kx, kt, ky = jax.random.split(key, 4)
    params = init_generator_params(k_params, input_dim, h_dim)

    x = jax.random.normal(kx, (batch, input_dim), dtype=jnp.float32)
    t = (jax.random.uniform(kt, (batch, 1)) > 0.5).astype(jnp.float32)
    y = jax.random.normal(ky, (batch, 1), dtype=jnp.float32)

    out = generator_forward(params, x, t, y)
    out = jax.block_until_ready(out)

    ref = generator_reference(params, x, t, y)
    assert out.shape == (batch, 2)
    # bf16 MXU operands with f32 accumulation -> loose tolerance vs f32 ref.
    assert jnp.allclose(out, ref, atol=1e-1, rtol=1e-1), (
        f"max abs diff {jnp.max(jnp.abs(out - ref))}")

    print("KERNEL_OK")
</pallas_src>

<mosaic_0001>
module attributes {stable_mosaic.version = 11 : i64} {
  func.func @_generator_kernel(%arg0: i32, %arg1: memref<56x30xf32, #tpu.memory_space<vmem>>, %arg2: memref<56x1xf32, #tpu.memory_space<vmem>>, %arg3: memref<56x1xf32, #tpu.memory_space<vmem>>, %arg4: memref<30x32xbf16, #tpu.memory_space<vmem>>, %arg5: memref<1x32xf32, #tpu.memory_space<vmem>>, %arg6: memref<1x32xf32, #tpu.memory_space<vmem>>, %arg7: memref<1x32xf32, #tpu.memory_space<vmem>>, %arg8: memref<32x32xbf16, #tpu.memory_space<vmem>>, %arg9: memref<1x32xf32, #tpu.memory_space<vmem>>, %arg10: memref<32x64xbf16, #tpu.memory_space<vmem>>, %arg11: memref<1x64xf32, #tpu.memory_space<vmem>>, %arg12: memref<1x64xf32, #tpu.memory_space<vmem>>, %arg13: memref<1x2xf32, #tpu.memory_space<vmem>>, %arg14: memref<56x2xf32, #tpu.memory_space<vmem>>) attributes {dimension_semantics = [#tpu.dimension_semantics<parallel>], iteration_bounds = array<i64: 1>, scalar_prefetch = 0 : i64, scratch_operands = 0 : i64, tpu.core_type = #tpu.core_type<tc>, window_params = [{transform_indices = @transform_0, window_bounds = array<i64: 56, 30>}, {transform_indices = @transform_1, window_bounds = array<i64: 56, 1>}, {transform_indices = @transform_2, window_bounds = array<i64: 56, 1>}, {pipeline_mode = #tpu.pipeline_mode<synchronous>, transform_indices = @transform_3, window_bounds = array<i64: 30, 32>}, {pipeline_mode = #tpu.pipeline_mode<synchronous>, transform_indices = @transform_4, window_bounds = array<i64: 1, 32>}, {pipeline_mode = #tpu.pipeline_mode<synchronous>, transform_indices = @transform_5, window_bounds = array<i64: 1, 32>}, {pipeline_mode = #tpu.pipeline_mode<synchronous>, transform_indices = @transform_6, window_bounds = array<i64: 1, 32>}, {pipeline_mode = #tpu.pipeline_mode<synchronous>, transform_indices = @transform_7, window_bounds = array<i64: 32, 32>}, {pipeline_mode = #tpu.pipeline_mode<synchronous>, transform_indices = @transform_8, window_bounds = array<i64: 1, 32>}, {pipeline_mode = #tpu.pipeline_mode<synchronous>, transform_indices = @transform_9, window_bounds = array<i64: 32, 64>}, {pipeline_mode = #tpu.pipeline_mode<synchronous>, transform_indices = @transform_10, window_bounds = array<i64: 1, 64>}, {pipeline_mode = #tpu.pipeline_mode<synchronous>, transform_indices = @transform_11, window_bounds = array<i64: 1, 64>}, {pipeline_mode = #tpu.pipeline_mode<synchronous>, transform_indices = @transform_12, window_bounds = array<i64: 1, 2>}, {transform_indices = @transform_13, window_bounds = array<i64: 56, 2>}]} {
    %c0 = arith.constant 0 : index
    %c0_0 = arith.constant 0 : index
    %0 = vector.load %arg1[%c0, %c0_0] : memref<56x30xf32, #tpu.memory_space<vmem>>, vector<56x30xf32>
    %1 = arith.truncf %0 : vector<56x30xf32> to vector<56x30xbf16>
    %c0_1 = arith.constant 0 : index
    %c0_2 = arith.constant 0 : index
    %2 = vector.load %arg4[%c0_1, %c0_2] : memref<30x32xbf16, #tpu.memory_space<vmem>>, vector<30x32xbf16>
    %cst = arith.constant dense<0.000000e+00> : vector<56x32xf32>
    %3 = tpu.matmul %1, %2, %cst {dimension_numbers = #tpu.dot_dimension_numbers<[1], [0], [0], [1], [0, 0, 1, 1], [], []>} : vector<56x30xbf16>, vector<30x32xbf16>, vector<56x32xf32> -> vector<56x32xf32>
    %c0_3 = arith.constant 0 : index
    %c0_4 = arith.constant 0 : index
    %4 = vector.load %arg2[%c0_3, %c0_4] : memref<56x1xf32, #tpu.memory_space<vmem>>, vector<56x1xf32>
    %c0_5 = arith.constant 0 : index
    %c0_6 = arith.constant 0 : index
    %5 = vector.load %arg5[%c0_5, %c0_6] : memref<1x32xf32, #tpu.memory_space<vmem>>, vector<1x32xf32>
    %6 = vector.broadcast %4 : vector<56x1xf32> to vector<56x32xf32>
    %7 = vector.broadcast %5 : vector<1x32xf32> to vector<56x32xf32>
    %8 = arith.mulf %6, %7 : vector<56x32xf32>
    %9 = arith.addf %3, %8 : vector<56x32xf32>
    %c0_7 = arith.constant 0 : index
    %c0_8 = arith.constant 0 : index
    %10 = vector.load %arg3[%c0_7, %c0_8] : memref<56x1xf32, #tpu.memory_space<vmem>>, vector<56x1xf32>
    %c0_9 = arith.constant 0 : index
    %c0_10 = arith.constant 0 : index
    %11 = vector.load %arg6[%c0_9, %c0_10] : memref<1x32xf32, #tpu.memory_space<vmem>>, vector<1x32xf32>
    %12 = vector.broadcast %10 : vector<56x1xf32> to vector<56x32xf32>
    %13 = vector.broadcast %11 : vector<1x32xf32> to vector<56x32xf32>
    %14 = arith.mulf %12, %13 : vector<56x32xf32>
    %15 = arith.addf %9, %14 : vector<56x32xf32>
    %c0_11 = arith.constant 0 : index
    %c0_12 = arith.constant 0 : index
    %16 = vector.load %arg7[%c0_11, %c0_12] : memref<1x32xf32, #tpu.memory_space<vmem>>, vector<1x32xf32>
    %17 = vector.broadcast %16 : vector<1x32xf32> to vector<56x32xf32>
    %18 = arith.addf %15, %17 : vector<56x32xf32>
    %cst_13 = arith.constant 0.000000e+00 : f32
    %19 = vector.broadcast %cst_13 : f32 to vector<56x32xf32>
    %20 = arith.maximumf %18, %19 : vector<56x32xf32>
    %21 = arith.truncf %20 : vector<56x32xf32> to vector<56x32xbf16>
    %c0_14 = arith.constant 0 : index
    %c0_15 = arith.constant 0 : index
    %22 = vector.load %arg8[%c0_14, %c0_15] : memref<32x32xbf16, #tpu.memory_space<vmem>>, vector<32x32xbf16>
    %cst_16 = arith.constant dense<0.000000e+00> : vector<56x32xf32>
    %23 = tpu.matmul %21, %22, %cst_16 {dimension_numbers = #tpu.dot_dimension_numbers<[1], [0], [0], [1], [0, 0, 1, 1], [], []>} : vector<56x32xbf16>, vector<32x32xbf16>, vector<56x32xf32> -> vector<56x32xf32>
    %c0_17 = arith.constant 0 : index
    %c0_18 = arith.constant 0 : index
    %24 = vector.load %arg9[%c0_17, %c0_18] : memref<1x32xf32, #tpu.memory_space<vmem>>, vector<1x32xf32>
    %25 = vector.broadcast %24 : vector<1x32xf32> to vector<56x32xf32>
    %26 = arith.addf %23, %25 : vector<56x32xf32>
    %cst_19 = arith.constant 0.000000e+00 : f32
    %27 = vector.broadcast %cst_19 : f32 to vector<56x32xf32>
    %28 = arith.maximumf %26, %27 : vector<56x32xf32>
    %29 = arith.truncf %28 : vector<56x32xf32> to vector<56x32xbf16>
    %c0_20 = arith.constant 0 : index
    %c0_21 = arith.constant 0 : index
    %30 = vector.load %arg10[%c0_20, %c0_21] : memref<32x64xbf16, #tpu.memory_space<vmem>>, vector<32x64xbf16>
    %cst_22 = arith.constant dense<0.000000e+00> : vector<56x64xf32>
    %31 = tpu.matmul %29, %30, %cst_22 {dimension_numbers = #tpu.dot_dimension_numbers<[1], [0], [0], [1], [0, 0, 1, 1], [], []>} : vector<56x32xbf16>, vector<32x64xbf16>, vector<56x64xf32> -> vector<56x64xf32>
    %c0_23 = arith.constant 0 : index
    %c0_24 = arith.constant 0 : index
    %32 = vector.load %arg11[%c0_23, %c0_24] : memref<1x64xf32, #tpu.memory_space<vmem>>, vector<1x64xf32>
    %33 = vector.broadcast %32 : vector<1x64xf32> to vector<56x64xf32>
    %34 = arith.addf %31, %33 : vector<56x64xf32>
    %cst_25 = arith.constant 0.000000e+00 : f32
    %35 = vector.broadcast %cst_25 : f32 to vector<56x64xf32>
    %36 = arith.maximumf %34, %35 : vector<56x64xf32>
    %c0_26 = arith.constant 0 : index
    %c0_27 = arith.constant 0 : index
    %37 = vector.load %arg12[%c0_26, %c0_27] : memref<1x64xf32, #tpu.memory_space<vmem>>, vector<1x64xf32>
    %38 = vector.broadcast %37 : vector<1x64xf32> to vector<56x64xf32>
    %39 = arith.mulf %36, %38 : vector<56x64xf32>
    %40 = vector.extract_strided_slice %39 {offsets = [0, 0], sizes = [56, 32], strides = [1, 1]} : vector<56x64xf32> to vector<56x32xf32>
    %cst_28 = arith.constant dense<0.000000e+00> : vector<56xf32>
    %41 = vector.multi_reduction <add>, %40, %cst_28 [1] : vector<56x32xf32> to vector<56xf32>
    %42 = vector.shape_cast %41 : vector<56xf32> to vector<56x1xf32>
    %43 = vector.extract_strided_slice %39 {offsets = [0, 32], sizes = [56, 32], strides = [1, 1]} : vector<56x64xf32> to vector<56x32xf32>
    %cst_29 = arith.constant dense<0.000000e+00> : vector<56xf32>
    %44 = vector.multi_reduction <add>, %43, %cst_29 [1] : vector<56x32xf32> to vector<56xf32>
    %45 = vector.shape_cast %44 : vector<56xf32> to vector<56x1xf32>
    %46 = tpu.concatenate %42, %45 in 1 : vector<56x1xf32>, vector<56x1xf32> -> vector<56x2xf32>
    %c0_30 = arith.constant 0 : index
    %c0_31 = arith.constant 0 : index
    %47 = vector.load %arg13[%c0_30, %c0_31] : memref<1x2xf32, #tpu.memory_space<vmem>>, vector<1x2xf32>
    %48 = vector.broadcast %47 : vector<1x2xf32> to vector<56x2xf32>
    %49 = arith.addf %46, %48 : vector<56x2xf32>
    %c0_32 = arith.constant 0 : index
    %c0_33 = arith.constant 0 : index
    %50 = vector.load %arg14[%c0_32, %c0_33] : memref<56x2xf32, #tpu.memory_space<vmem>>, vector<56x2xf32>
    tpu.vector_store %arg14[%c0_32, %c0_33], %49 {strides = array<i32>} : memref<56x2xf32, #tpu.memory_space<vmem>>, vector<56x2xf32>,
    return
  }
  func.func @transform_0(%arg0: i32) -> (i32, i32) {
    %c0_i32 = arith.constant 0 : i32
    %c0_i32_0 = arith.constant 0 : i32
    return %arg0, %c0_i32 : i32, i32
  }
  func.func @transform_1(%arg0: i32) -> (i32, i32) {
    %c0_i32 = arith.constant 0 : i32
    %c0_i32_0 = arith.constant 0 : i32
    return %arg0, %c0_i32 : i32, i32
  }
  func.func @transform_2(%arg0: i32) -> (i32, i32) {
    %c0_i32 = arith.constant 0 : i32
    %c0_i32_0 = arith.constant 0 : i32
    return %arg0, %c0_i32 : i32, i32
  }
  func.func @transform_3(%arg0: i32) -> (i32, i32) {
    %c0_i32 = arith.constant 0 : i32
    %c0_i32_0 = arith.constant 0 : i32
    %c0_i32_1 = arith.constant 0 : i32
    return %c0_i32, %c0_i32_0 : i32, i32
  }
  func.func @transform_4(%arg0: i32) -> (i32, i32) {
    %c0_i32 = arith.constant 0 : i32
    %c0_i32_0 = arith.constant 0 : i32
    %c0_i32_1 = arith.constant 0 : i32
    return %c0_i32, %c0_i32_0 : i32, i32
  }
  func.func @transform_5(%arg0: i32) -> (i32, i32) {
    %c0_i32 = arith.constant 0 : i32
    %c0_i32_0 = arith.constant 0 : i32
    %c0_i32_1 = arith.constant 0 : i32
    return %c0_i32, %c0_i32_0 : i32, i32
  }
  func.func @transform_6(%arg0: i32) -> (i32, i32) {
    %c0_i32 = arith.constant 0 : i32
    %c0_i32_0 = arith.constant 0 : i32
    %c0_i32_1 = arith.constant 0 : i32
    return %c0_i32, %c0_i32_0 : i32, i32
  }
  func.func @transform_7(%arg0: i32) -> (i32, i32) {
    %c0_i32 = arith.constant 0 : i32
    %c0_i32_0 = arith.constant 0 : i32
    %c0_i32_1 = arith.constant 0 : i32
    return %c0_i32, %c0_i32_0 : i32, i32
  }
  func.func @transform_8(%arg0: i32) -> (i32, i32) {
    %c0_i32 = arith.constant 0 : i32
    %c0_i32_0 = arith.constant 0 : i32
    %c0_i32_1 = arith.constant 0 : i32
    return %c0_i32, %c0_i32_0 : i32, i32
  }
  func.func @transform_9(%arg0: i32) -> (i32, i32) {
    %c0_i32 = arith.constant 0 : i32
    %c0_i32_0 = arith.constant 0 : i32
    %c0_i32_1 = arith.constant 0 : i32
    return %c0_i32, %c0_i32_0 : i32, i32
  }
  func.func @transform_10(%arg0: i32) -> (i32, i32) {
    %c0_i32 = arith.constant 0 : i32
    %c0_i32_0 = arith.constant 0 : i32
    %c0_i32_1 = arith.constant 0 : i32
    return %c0_i32, %c0_i32_0 : i32, i32
  }
  func.func @transform_11(%arg0: i32) -> (i32, i32) {
    %c0_i32 = arith.constant 0 : i32
    %c0_i32_0 = arith.constant 0 : i32
    %c0_i32_1 = arith.constant 0 : i32
    return %c0_i32, %c0_i32_0 : i32, i32
  }
  func.func @transform_12(%arg0: i32) -> (i32, i32) {
    %c0_i32 = arith.constant 0 : i32
    %c0_i32_0 = arith.constant 0 : i32
    %c0_i32_1 = arith.constant 0 : i32
    return %c0_i32, %c0_i32_0 : i32, i32
  }
  func.func @transform_13(%arg0: i32) -> (i32, i32) {
    %c0_i32 = arith.constant 0 : i32
    %c0_i32_0 = arith.constant 0 : i32
    return %arg0, %c0_i32 : i32, i32
  }
}

</mosaic_0001>

<llo_original>
// kernel: tpu_custom_call.1
$region0: #{tpu_custom_call.1}
  #allocation0 [shape = 'u32[]', space=smem, size = 0x4, offset = 0x4, fixed_abs, tag = 'smem constant byte address 0x4 - core index']
  #allocation1 [shape = 'u32[144,128]{1,0:T(1,128)}', space=vmem, size = 0x12000, scoped, tag = 'internal scratch']
  %s0 = inlined_call_operand.vmem [shape: f32[56,30], index: 0, kind: input, shape index: {}]
  %s1 = inlined_call_operand.vmem [shape: f32[56,1], index: 1, kind: input, shape index: {}]
  %s2 = inlined_call_operand.vmem [shape: f32[56,1], index: 2, kind: input, shape index: {}]
  %s3 = inlined_call_operand.vmem [shape: bf16[30,32], index: 3, kind: input, shape index: {}]
  %s4 = inlined_call_operand.vmem [shape: f32[1,32], index: 4, kind: input, shape index: {}]
  %s5 = inlined_call_operand.vmem [shape: f32[1,32], index: 5, kind: input, shape index: {}]
  %s6 = inlined_call_operand.vmem [shape: f32[1,32], index: 6, kind: input, shape index: {}]
  %s7 = inlined_call_operand.vmem [shape: bf16[32,32], index: 7, kind: input, shape index: {}]
  %s8 = inlined_call_operand.vmem [shape: f32[1,32], index: 8, kind: input, shape index: {}]
  %s9 = inlined_call_operand.vmem [shape: bf16[32,64], index: 9, kind: input, shape index: {}]
  %s10 = inlined_call_operand.vmem [shape: f32[1,64], index: 10, kind: input, shape index: {}]
  %s11 = inlined_call_operand.vmem [shape: f32[1,64], index: 11, kind: input, shape index: {}]
  %s12 = inlined_call_operand.vmem [shape: f32[1,2], index: 12, kind: input, shape index: {}]
  %s13 = inlined_call_operand.vmem [shape: f32[56,2], index: 13, kind: output, shape index: {}]
  %s14 = sld [smem:[#allocation0]]
  $region62: #{tpu_custom_call.1} parent=0
    _
  %s16 = ssub.s32 1, %s14
  %s17 = scalar_select 0, %s16, %s14
  // Predicated region
  $region2: #{tpu_custom_call.1} parent=0 // pred_check
    _
  $region3: #{tpu_custom_call.1} parent=0 // pred_check_branch
    %19 = sbr.rel (0) target = $region5
  $region4: #{tpu_custom_call.1} parent=0 // pred_region
    _
  $region5: #{tpu_custom_call.1} parent=0 // pred_fallthru
    _
  // Predicated region
  $region6: #{tpu_custom_call.1} parent=0 // pred_check
    _
  $region7: #{tpu_custom_call.1} parent=0 // pred_check_branch
    %21 = sbr.rel (0) target = $region9
  $region8: #{tpu_custom_call.1} parent=0 // pred_region
    _
  $region9: #{tpu_custom_call.1} parent=0 // pred_fallthru
    _
  // Predicated region
  $region10: #{tpu_custom_call.1} parent=0 // pred_check
    _
  $region11: #{tpu_custom_call.1} parent=0 // pred_check_branch
    %23 = sbr.rel (0) target = $region13
  $region12: #{tpu_custom_call.1} parent=0 // pred_region
    _
  $region13: #{tpu_custom_call.1} parent=0 // pred_fallthru
    _
  // Predicated region
  $region14: #{tpu_custom_call.1} parent=0 // pred_check
    _
  $region15: #{tpu_custom_call.1} parent=0 // pred_check_branch
    %25 = sbr.rel (0) target = $region17
  $region16: #{tpu_custom_call.1} parent=0 // pred_region
    _
  $region17: #{tpu_custom_call.1} parent=0 // pred_fallthru
    _
  // Predicated region
  $region18: #{tpu_custom_call.1} parent=0 // pred_check
    _
  $region19: #{tpu_custom_call.1} parent=0 // pred_check_branch
    %27 = sbr.rel (0) target = $region21
  $region20: #{tpu_custom_call.1} parent=0 // pred_region
    _
  $region21: #{tpu_custom_call.1} parent=0 // pred_fallthru
    _
  // Predicated region
  $region22: #{tpu_custom_call.1} parent=0 // pred_check
    _
  $region23: #{tpu_custom_call.1} parent=0 // pred_check_branch
    %29 = sbr.rel (0) target = $region25
  $region24: #{tpu_custom_call.1} parent=0 // pred_region
    _
  $region25: #{tpu_custom_call.1} parent=0 // pred_fallthru
    _
  // Predicated region
  $region26: #{tpu_custom_call.1} parent=0 // pred_check
    _
  $region27: #{tpu_custom_call.1} parent=0 // pred_check_branch
    %31 = sbr.rel (0) target = $region29
  $region28: #{tpu_custom_call.1} parent=0 // pred_region
    _
  $region29: #{tpu_custom_call.1} parent=0 // pred_fallthru
    _
  // Predicated region
  $region30: #{tpu_custom_call.1} parent=0 // pred_check
    _
  $region31: #{tpu_custom_call.1} parent=0 // pred_check_branch
    %33 = sbr.rel (0) target = $region33
  $region32: #{tpu_custom_call.1} parent=0 // pred_region
    _
  $region33: #{tpu_custom_call.1} parent=0 // pred_fallthru
    _
  // Predicated region
  $region34: #{tpu_custom_call.1} parent=0 // pred_check
    _
  $region35: #{tpu_custom_call.1} parent=0 // pred_check_branch
    %35 = sbr.rel (0) target = $region37
  $region36: #{tpu_custom_call.1} parent=0 // pred_region
    _
  $region37: #{tpu_custom_call.1} parent=0 // pred_fallthru
    _
  // Predicated region
  $region38: #{tpu_custom_call.1} parent=0 // pred_check
    _
  $region39: #{tpu_custom_call.1} parent=0 // pred_check_branch
    %37 = sbr.rel (0) target = $region41
  $region40: #{tpu_custom_call.1} parent=0 // pred_region
    _
  $region41: #{tpu_custom_call.1} parent=0 // pred_fallthru
    _
  // Predicated region
  $region42: #{tpu_custom_call.1} parent=0 // pred_check
    _
  $region43: #{tpu_custom_call.1} parent=0 // pred_check_branch
    %39 = sbr.rel (0) target = $region45
  $region44: #{tpu_custom_call.1} parent=0 // pred_region
    _
  $region45: #{tpu_custom_call.1} parent=0 // pred_fallthru
    _
  // Predicated region
  $region46: #{tpu_custom_call.1} parent=0 // pred_check
    _
  $region47: #{tpu_custom_call.1} parent=0 // pred_check_branch
    %41 = sbr.rel (0) target = $region49
  $region48: #{tpu_custom_call.1} parent=0 // pred_region
    _
  $region49: #{tpu_custom_call.1} parent=0 // pred_fallthru
    _
  // Predicated region
  $region50: #{tpu_custom_call.1} parent=0 // pred_check
    _
  $region51: #{tpu_custom_call.1} parent=0 // pred_check_branch
    %43 = sbr.rel (0) target = $region53
  $region52: #{tpu_custom_call.1} parent=0 // pred_region
    _
  $region53: #{tpu_custom_call.1} parent=0 // pred_fallthru
    _
  %v45 = vld [vmem:[%s0] sm:$0xff]
  %v46 = vld [vmem:[%s0 + $0x8] sm:$0xff]
  %v47 = vld [vmem:[%s0 + $0x10] sm:$0xff]
  %v48 = vld [vmem:[%s0 + $0x18] sm:$0xff]
  %v49 = vld [vmem:[%s0 + $0x20] sm:$0xff]
  %v50 = vld [vmem:[%s0 + $0x28] sm:$0xff]
  %v51 = vld [vmem:[%s0 + $0x30] sm:$0xff]
  %v52 = vpack.c.bf16 %v46, %v45
  %v53 = vpack.c.bf16 %v48, %v47
  %v54 = vpack.c.bf16 %v50, %v49
  %v55 = vpack.c.bf16 %v51, %v51
  %v56 = vld [vmem:[%s3] sm:$0xf]
  %v57 = vld [vmem:[%s3 + $0x4] sm:$0xf]
  %v58 = vld [vmem:[%s3 + $0x8] sm:$0xf]
  %v59 = vld [vmem:[%s3 + $0xc] sm:$0x7]
  %v60 = vld [vmem:[%s1] sm:$0xff]
  %v61 = vld [vmem:[%s1 + $0x8] sm:$0xff]
  %v62 = vld [vmem:[%s1 + $0x10] sm:$0xff]
  %v63 = vld [vmem:[%s1 + $0x18] sm:$0xff]
  %v64 = vld [vmem:[%s1 + $0x20] sm:$0xff]
  %v65 = vld [vmem:[%s1 + $0x28] sm:$0xff]
  %v66 = vld [vmem:[%s1 + $0x30] sm:$0xff]
  %v67 = vld [vmem:[%s4] sm:$0x1]
  %69 = vset.pattern.permute.xlu0 0
  %70 = vperm.xlu0 %69, %v60
  %v71 = vpop.permute.xlu0 %70
  %74 = vset.pattern.permute.xlu0 0
  %75 = vperm.xlu0 %74, %v61
  %v76 = vpop.permute.xlu0 %75
  %79 = vset.pattern.permute.xlu0 0
  %80 = vperm.xlu0 %79, %v62
  %v81 = vpop.permute.xlu0 %80
  %84 = vset.pattern.permute.xlu0 0
  %85 = vperm.xlu0 %84, %v63
  %v86 = vpop.permute.xlu0 %85
  %89 = vset.pattern.permute.xlu0 0
  %90 = vperm.xlu0 %89, %v64
  %v91 = vpop.permute.xlu0 %90
  %94 = vset.pattern.permute.xlu0 0
  %95 = vperm.xlu0 %94, %v65
  %v96 = vpop.permute.xlu0 %95
  %99 = vset.pattern.permute.xlu0 0
  %100 = vperm.xlu0 %99, %v66
  %v101 = vpop.permute.xlu0 %100
  %v104 = vlaneseq
  %v105 = vshrl.u32 %v104, 7
  %v106 = vsub.s32 0, %v105
  %v107 = vrot.slane %v67, %v106
  %v109 = vmul.f32 %v71, %v107
  %v110 = vmul.f32 %v76, %v107
  %v111 = vmul.f32 %v81, %v107
  %v112 = vmul.f32 %v86, %v107
  %v113 = vmul.f32 %v91, %v107
  %v114 = vmul.f32 %v96, %v107
  %v115 = vmul.f32 %v101, %v107
  %v120 = vunpack.c.l.b16 %v56
  %v121 = vunpack.c.l.b16 %v57
  %v122 = vunpack.c.l.b16 %v58
  %v123 = vunpack.c.l.b16 %v59
  %v124 = vpack.c.b16 %v121, %v120
  %v125 = vpack.c.b16 %v123, %v122
  %vm127 = vcmask 244736
  %v129 = vsel %vm127, %v52, 0
  %v132 = vsel %vm127, %v53, 0
  %v135 = vsel %vm127, %v54, 0
  %v138 = vsel %vm127, %v55, 0
  %vm140 = vcmask 1046528
  %v142 = vsel %vm140, %v125, 0
  %144 = vmatprep.subr.bf16.mxu0 0
  %145 = vmatpush1.bf16.msra.mxu0 %v124
  %146 = vmatprep.subr.bf16.mxu0 0
  %147 = vmatpush1.bf16.msra.mxu0 %v142
  %148 = vmatprep.subr.bf16.mxu0 0
  %149 = vmatpush1.bf16.msra.mxu0 0
  %150 = vmatprep.subr.bf16.mxu0 0
  %151 = vmatpush1.bf16.msra.mxu0 0
  %152 = vmatprep.subr.bf16.mxu0 0
  %153 = vmatpush1.bf16.msra.mxu0 0
  %154 = vmatprep.subr.bf16.mxu0 0
  %155 = vmatpush1.bf16.msra.mxu0 0
  %156 = vmatprep.subr.bf16.mxu0 0
  %157 = vmatpush1.bf16.msra.mxu0 0
  %158 = vmatprep.subr.bf16.mxu0 0
  %159 = vmatpush1.bf16.msra.mxu0 0
  %160 = vmatprep.subr.bf16.mxu0 0
  %161 = vmatpush1.bf16.msra.mxu0 0
  %162 = vmatprep.subr.bf16.mxu0 0
  %163 = vmatpush1.bf16.msra.mxu0 0
  %164 = vmatprep.subr.bf16.mxu0 0
  %165 = vmatpush1.bf16.msra.mxu0 0
  %166 = vmatprep.subr.bf16.mxu0 0
  %167 = vmatpush1.bf16.msra.mxu0 0
  %168 = vmatprep.subr.bf16.mxu0 0
  %169 = vmatpush1.bf16.msra.mxu0 0
  %170 = vmatprep.subr.bf16.mxu0 0
  %171 = vmatpush1.bf16.msra.mxu0 0
  %172 = vmatprep.subr.bf16.mxu0 0
  %173 = vmatpush1.bf16.msra.mxu0 0
  %174 = vmatprep.subr.bf16.mxu0 0
  %175 = vmatpush1.bf16.msra.mxu0 0
  %176 = vmatprep.mubr.bf16.mxu0 0
  %177 = vmatmul.mubr.bf16.gmra.mrb[0].mxu0 %v129
  %v178 = vpop.f32.mrb[0].mxu0
  %v179 = vadd.f32 %v109, %v178
  %v180 = vpop.f32.mrb[0].mxu0
  %v181 = vpop.f32.mrb[0].mxu0
  %v182 = vadd.f32 %v110, %v181
  %v183 = vpop.f32.mrb[0].mxu0
  %184 = vmatprep.mubr.bf16.mxu0 0
  %185 = vmatmul.mubr.bf16.gmra.mrb[0].mxu0 %v132
  %v186 = vpop.f32.mrb[0].mxu0
  %v187 = vadd.f32 %v111, %v186
  %v188 = vpop.f32.mrb[0].mxu0
  %v189 = vpop.f32.mrb[0].mxu0
  %v190 = vadd.f32 %v112, %v189
  %v191 = vpop.f32.mrb[0].mxu0
  %192 = vmatprep.mubr.bf16.mxu0 0
  %193 = vmatmul.mubr.bf16.gmra.mrb[0].mxu0 %v135
  %v194 = vpop.f32.mrb[0].mxu0
  %v195 = vadd.f32 %v113, %v194
  %v196 = vpop.f32.mrb[0].mxu0
  %v197 = vpop.f32.mrb[0].mxu0
  %v198 = vadd.f32 %v114, %v197
  %v199 = vpop.f32.mrb[0].mxu0
  %200 = vmatprep.mubr.bf16.mxu0 0
  %201 = vmatmul.mubr.bf16.gmra.mrb[0].mxu0 %v138
  %v202 = vpop.f32.mrb[0].mxu0
  %v203 = vadd.f32 %v115, %v202
  %v204 = vpop.f32.mrb[0].mxu0
  %v205 = vpop.f32.mrb[0].mxu0
  %v206 = vpop.f32.mrb[0].mxu0
  %207 = vdwg.mxu0
  %v208 = vld [vmem:[%s2] sm:$0xff]
  %v209 = vld [vmem:[%s2 + $0x8] sm:$0xff]
  %v210 = vld [vmem:[%s2 + $0x10] sm:$0xff]
  %v211 = vld [vmem:[%s2 + $0x18] sm:$0xff]
  %v212 = vld [vmem:[%s2 + $0x20] sm:$0xff]
  %v213 = vld [vmem:[%s2 + $0x28] sm:$0xff]
  %v214 = vld [vmem:[%s2 + $0x30] sm:$0xff]
  %v215 = vld [vmem:[%s5] sm:$0x1]
  %217 = vset.pattern.permute.xlu0 0
  %218 = vperm.xlu0 %217, %v208
  %v219 = vpop.permute.xlu0 %218
  %222 = vset.pattern.permute.xlu0 0
  %223 = vperm.xlu0 %222, %v209
  %v224 = vpop.permute.xlu0 %223
  %227 = vset.pattern.permute.xlu0 0
  %228 = vperm.xlu0 %227, %v210
  %v229 = vpop.permute.xlu0 %228
  %232 = vset.pattern.permute.xlu0 0
  %233 = vperm.xlu0 %232, %v211
  %v234 = vpop.permute.xlu0 %233
  %237 = vset.pattern.permute.xlu0 0
  %238 = vperm.xlu0 %237, %v212
  %v239 = vpop.permute.xlu0 %238
  %242 = vset.pattern.permute.xlu0 0
  %243 = vperm.xlu0 %242, %v213
  %v244 = vpop.permute.xlu0 %243
  %247 = vset.pattern.permute.xlu0 0
  %248 = vperm.xlu0 %247, %v214
  %v249 = vpop.permute.xlu0 %248
  %v252 = vlaneseq
  %v253 = vshrl.u32 %v252, 7
  %v254 = vsub.s32 0, %v253
  %v255 = vrot.slane %v215, %v254
  %v257 = vmul.f32 %v219, %v255
  %v258 = vmul.f32 %v224, %v255
  %v259 = vmul.f32 %v229, %v255
  %v260 = vmul.f32 %v234, %v255
  %v261 = vmul.f32 %v239, %v255
  %v262 = vmul.f32 %v244, %v255
  %v263 = vmul.f32 %v249, %v255
  %v264 = vadd.f32 %v179, %v257
  %v265 = vadd.f32 %v182, %v258
  %v266 = vadd.f32 %v187, %v259
  %v267 = vadd.f32 %v190, %v260
  %v268 = vadd.f32 %v195, %v261
  %v269 = vadd.f32 %v198, %v262
  %v270 = vadd.f32 %v203, %v263
  %v271 = vld [vmem:[%s6] sm:$0x1]
  %v273 = vlaneseq
  %v274 = vshrl.u32 %v273, 7
  %v275 = vsub.s32 0, %v274
  %v276 = vrot.slane %v271, %v275
  %v278 = vadd.f32 %v264, %v276
  %v279 = vadd.f32 %v265, %v276
  %v280 = vadd.f32 %v266, %v276
  %v281 = vadd.f32 %v267, %v276
  %v282 = vadd.f32 %v268, %v276
  %v283 = vadd.f32 %v269, %v276
  %v284 = vadd.f32 %v270, %v276
  %v285 = vmax.f32 %v278, 0.0
  %v286 = vmax.f32 %v279, 0.0
  %v287 = vmax.f32 %v280, 0.0
  %v288 = vmax.f32 %v281, 0.0
  %v289 = vmax.f32 %v282, 0.0
  %v290 = vmax.f32 %v283, 0.0
  %v291 = vmax.f32 %v284, 0.0
  %v292 = vpack.c.bf16 %v286, %v285
  %v293 = vpack.c.bf16 %v288, %v287
  %v294 = vpack.c.bf16 %v290, %v289
  %v295 = vpack.c.bf16 %v291, %v291
  %v296 = vld [vmem:[%s7] sm:$0xf]
  %v297 = vld [vmem:[%s7 + $0x4] sm:$0xf]
  %v298 = vld [vmem:[%s7 + $0x8] sm:$0xf]
  %v299 = vld [vmem:[%s7 + $0xc] sm:$0xf]
  %v300 = vld [vmem:[%s8] sm:$0x1]
  %v302 = vlaneseq
  %v303 = vshrl.u32 %v302, 7
  %v304 = vsub.s32 0, %v303
  %v305 = vrot.slane %v300, %v304
  %v311 = vunpack.c.l.b16 %v296
  %v312 = vunpack.c.l.b16 %v297
  %v313 = vunpack.c.l.b16 %v298
  %v314 = vunpack.c.l.b16 %v299
  %v315 = vpack.c.b16 %v312, %v311
  %v316 = vpack.c.b16 %v314, %v313
  %vm319 = vcmask 261120
  %v321 = vsel %vm319, %v292, 0
  %v324 = vsel %vm319, %v293, 0
  %v327 = vsel %vm319, %v294, 0
  %v330 = vsel %vm319, %v295, 0
  %332 = vmatprep.subr.bf16.mxu0 0
  %333 = vmatpush1.bf16.msra.mxu0 %v315
  %334 = vmatprep.subr.bf16.mxu0 0
  %335 = vmatpush1.bf16.msra.mxu0 %v316
  %336 = vmatprep.subr.bf16.mxu0 0
  %337 = vmatpush1.bf16.msra.mxu0 0
  %338 = vmatprep.subr.bf16.mxu0 0
  %339 = vmatpush1.bf16.msra.mxu0 0
  %340 = vmatprep.subr.bf16.mxu0 0
  %341 = vmatpush1.bf16.msra.mxu0 0
  %342 = vmatprep.subr.bf16.mxu0 0
  %343 = vmatpush1.bf16.msra.mxu0 0
  %344 = vmatprep.subr.bf16.mxu0 0
  %345 = vmatpush1.bf16.msra.mxu0 0
  %346 = vmatprep.subr.bf16.mxu0 0
  %347 = vmatpush1.bf16.msra.mxu0 0
  %348 = vmatprep.subr.bf16.mxu0 0
  %349 = vmatpush1.bf16.msra.mxu0 0
  %350 = vmatprep.subr.bf16.mxu0 0
  %351 = vmatpush1.bf16.msra.mxu0 0
  %352 = vmatprep.subr.bf16.mxu0 0
  %353 = vmatpush1.bf16.msra.mxu0 0
  %354 = vmatprep.subr.bf16.mxu0 0
  %355 = vmatpush1.bf16.msra.mxu0 0
  %356 = vmatprep.subr.bf16.mxu0 0
  %357 = vmatpush1.bf16.msra.mxu0 0
  %358 = vmatprep.subr.bf16.mxu0 0
  %359 = vmatpush1.bf16.msra.mxu0 0
  %360 = vmatprep.subr.bf16.mxu0 0
  %361 = vmatpush1.bf16.msra.mxu0 0
  %362 = vmatprep.subr.bf16.mxu0 0
  %363 = vmatpush1.bf16.msra.mxu0 0
  %364 = vmatprep.mubr.bf16.mxu0 0
  %365 = vmatmul.mubr.bf16.gmra.mrb[0].mxu0 %v321
  %v366 = vpop.f32.mrb[0].mxu0
  %v367 = vadd.f32 %v305, %v366
  %v368 = vpop.f32.mrb[0].mxu0
  %v369 = vpop.f32.mrb[0].mxu0
  %v370 = vadd.f32 %v305, %v369
  %v371 = vpop.f32.mrb[0].mxu0
  %372 = vmatprep.mubr.bf16.mxu0 0
  %373 = vmatmul.mubr.bf16.gmra.mrb[0].mxu0 %v324
  %v374 = vpop.f32.mrb[0].mxu0
  %v375 = vadd.f32 %v305, %v374
  %v376 = vpop.f32.mrb[0].mxu0
  %v377 = vpop.f32.mrb[0].mxu0
  %v378 = vadd.f32 %v305, %v377
  %v379 = vpop.f32.mrb[0].mxu0
  %380 = vmatprep.mubr.bf16.mxu0 0
  %381 = vmatmul.mubr.bf16.gmra.mrb[0].mxu0 %v327
  %v382 = vpop.f32.mrb[0].mxu0
  %v383 = vadd.f32 %v305, %v382
  %v384 = vpop.f32.mrb[0].mxu0
  %v385 = vpop.f32.mrb[0].mxu0
  %v386 = vadd.f32 %v305, %v385
  %v387 = vpop.f32.mrb[0].mxu0
  %388 = vmatprep.mubr.bf16.mxu0 0
  %389 = vmatmul.mubr.bf16.gmra.mrb[0].mxu0 %v330
  %v390 = vpop.f32.mrb[0].mxu0
  %v391 = vadd.f32 %v305, %v390
  %v392 = vpop.f32.mrb[0].mxu0
  %v393 = vpop.f32.mrb[0].mxu0
  %v394 = vpop.f32.mrb[0].mxu0
  %395 = vdwg.mxu0
  %v396 = vmax.f32 %v367, 0.0
  %v397 = vmax.f32 %v370, 0.0
  %v398 = vmax.f32 %v375, 0.0
  %v399 = vmax.f32 %v378, 0.0
  %v400 = vmax.f32 %v383, 0.0
  %v401 = vmax.f32 %v386, 0.0
  %v402 = vmax.f32 %v391, 0.0
  %v403 = vpack.c.bf16 %v397, %v396
  %v404 = vpack.c.bf16 %v399, %v398
  %v405 = vpack.c.bf16 %v401, %v400
  %v406 = vpack.c.bf16 %v402, %v402
  %v407 = vld [vmem:[%s9] sm:$0xf]
  %v408 = vld [vmem:[%s9 + $0x4] sm:$0xf]
  %v409 = vld [vmem:[%s9 + $0x8] sm:$0xf]
  %v410 = vld [vmem:[%s9 + $0xc] sm:$0xf]
  %v411 = vld [vmem:[%s10] sm:$0x1]
  %v413 = vlaneseq
  %v414 = vshrl.u32 %v413, 7
  %v415 = vsub.s32 0, %v414
  %v416 = vrot.slane %v411, %v415
  %v422 = vunpack.c.l.b16 %v407
  %v423 = vunpack.c.l.b16 %v408
  %v424 = vunpack.c.l.b16 %v409
  %v425 = vunpack.c.l.b16 %v410
  %v426 = vpack.c.b16 %v423, %v422
  %v427 = vpack.c.b16 %v425, %v424
  %v431 = vsel %vm319, %v403, 0
  %v434 = vsel %vm319, %v404, 0
  %v437 = vsel %vm319, %v405, 0
  %v440 = vsel %vm319, %v406, 0
  %442 = vmatprep.subr.bf16.mxu0 0
  %443 = vmatpush1.bf16.msra.mxu0 %v426
  %444 = vmatprep.subr.bf16.mxu0 0
  %445 = vmatpush1.bf16.msra.mxu0 %v427
  %446 = vmatprep.subr.bf16.mxu0 0
  %447 = vmatpush1.bf16.msra.mxu0 0
  %448 = vmatprep.subr.bf16.mxu0 0
  %449 = vmatpush1.bf16.msra.mxu0 0
  %450 = vmatprep.subr.bf16.mxu0 0
  %451 = vmatpush1.bf16.msra.mxu0 0
  %452 = vmatprep.subr.bf16.mxu0 0
  %453 = vmatpush1.bf16.msra.mxu0 0
  %454 = vmatprep.subr.bf16.mxu0 0
  %455 = vmatpush1.bf16.msra.mxu0 0
  %456 = vmatprep.subr.bf16.mxu0 0
  %457 = vmatpush1.bf16.msra.mxu0 0
  %458 = vmatprep.subr.bf16.mxu0 0
  %459 = vmatpush1.bf16.msra.mxu0 0
  %460 = vmatprep.subr.bf16.mxu0 0
  %461 = vmatpush1.bf16.msra.mxu0 0
  %462 = vmatprep.subr.bf16.mxu0 0
  %463 = vmatpush1.bf16.msra.mxu0 0
  %464 = vmatprep.subr.bf16.mxu0 0
  %465 = vmatpush1.bf16.msra.mxu0 0
  %466 = vmatprep.subr.bf16.mxu0 0
  %467 = vmatpush1.bf16.msra.mxu0 0
  %468 = vmatprep.subr.bf16.mxu0 0
  %469 = vmatpush1.bf16.msra.mxu0 0
  %470 = vmatprep.subr.bf16.mxu0 0
  %471 = vmatpush1.bf16.msra.mxu0 0
  %472 = vmatprep.subr.bf16.mxu0 0
  %473 = vmatpush1.bf16.msra.mxu0 0
  %474 = vmatprep.mubr.bf16.mxu0 0
  %475 = vmatmul.mubr.bf16.gmra.mrb[0].mxu0 %v431
  %v476 = vpop.f32.mrb[0].mxu0
  %v477 = vadd.f32 %v416, %v476
  %v478 = vpop.f32.mrb[0].mxu0
  %v479 = vpop.f32.mrb[0].mxu0
  %v480 = vadd.f32 %v416, %v479
  %v481 = vpop.f32.mrb[0].mxu0
  %482 = vmatprep.mubr.bf16.mxu0 0
  %483 = vmatmul.mubr.bf16.gmra.mrb[0].mxu0 %v434
  %v484 = vpop.f32.mrb[0].mxu0
  %v485 = vadd.f32 %v416, %v484
  %v486 = vpop.f32.mrb[0].mxu0
  %v487 = vpop.f32.mrb[0].mxu0
  %v488 = vadd.f32 %v416, %v487
  %v489 = vpop.f32.mrb[0].mxu0
  %490 = vmatprep.mubr.bf16.mxu0 0
  %491 = vmatmul.mubr.bf16.gmra.mrb[0].mxu0 %v437
  %v492 = vpop.f32.mrb[0].mxu0
  %v493 = vadd.f32 %v416, %v492
  %v494 = vpop.f32.mrb[0].mxu0
  %v495 = vpop.f32.mrb[0].mxu0
  %v496 = vadd.f32 %v416, %v495
  %v497 = vpop.f32.mrb[0].mxu0
  %498 = vmatprep.mubr.bf16.mxu0 0
  %499 = vmatmul.mubr.bf16.gmra.mrb[0].mxu0 %v440
  %v500 = vpop.f32.mrb[0].mxu0
  %v501 = vadd.f32 %v416, %v500
  %v502 = vpop.f32.mrb[0].mxu0
  %v503 = vpop.f32.mrb[0].mxu0
  %v504 = vpop.f32.mrb[0].mxu0
  %505 = vdwg.mxu0
  %v506 = vmax.f32 %v477, 0.0
  %v507 = vmax.f32 %v480, 0.0
  %v508 = vmax.f32 %v485, 0.0
  %v509 = vmax.f32 %v488, 0.0
  %v510 = vmax.f32 %v493, 0.0
  %v511 = vmax.f32 %v496, 0.0
  %v512 = vmax.f32 %v501, 0.0
  %v513 = vld [vmem:[%s11] sm:$0x1]
  %v515 = vlaneseq
  %v516 = vshrl.u32 %v515, 7
  %v517 = vsub.s32 0, %v516
  %v518 = vrot.slane %v513, %v517
  %v520 = vmul.f32 %v506, %v518
  %v521 = vmul.f32 %v507, %v518
  %v522 = vmul.f32 %v508, %v518
  %v523 = vmul.f32 %v509, %v518
  %v524 = vmul.f32 %v510, %v518
  %v525 = vmul.f32 %v511, %v518
  %v526 = vmul.f32 %v512, %v518
  %v527 = vsel %vm319, %v520, 0.0
  %528 = vadd.xlane.f32.xlu0 %v527
  %v529 = vpop.xlane.xlu0 %528
  %v530 = vsel %vm319, %v521, 0.0
  %531 = vadd.xlane.f32.xlu0 %v530
  %v532 = vpop.xlane.xlu0 %531
  %v533 = vsel %vm319, %v522, 0.0
  %534 = vadd.xlane.f32.xlu0 %v533
  %v535 = vpop.xlane.xlu0 %534
  %v536 = vsel %vm319, %v523, 0.0
  %537 = vadd.xlane.f32.xlu0 %v536
  %v538 = vpop.xlane.xlu0 %537
  %v539 = vsel %vm319, %v524, 0.0
  %540 = vadd.xlane.f32.xlu0 %v539
  %v541 = vpop.xlane.xlu0 %540
  %v542 = vsel %vm319, %v525, 0.0
  %543 = vadd.xlane.f32.xlu0 %v542
  %v544 = vpop.xlane.xlu0 %543
  %v545 = vsel %vm319, %v526, 0.0
  %546 = vadd.xlane.f32.xlu0 %v545
  %v547 = vpop.xlane.xlu0 %546
  %555 = vrot.lane.b32.xlu0 %v520, 96
  %v556 = vpop.permute.xlu0 %555
  %557 = vrot.lane.b32.xlu0 %v521, 96
  %v558 = vpop.permute.xlu0 %557
  %559 = vrot.lane.b32.xlu0 %v522, 96
  %v560 = vpop.permute.xlu0 %559
  %561 = vrot.lane.b32.xlu0 %v523, 96
  %v562 = vpop.permute.xlu0 %561
  %563 = vrot.lane.b32.xlu0 %v524, 96
  %v564 = vpop.permute.xlu0 %563
  %565 = vrot.lane.b32.xlu0 %v525, 96
  %v566 = vpop.permute.xlu0 %565
  %567 = vrot.lane.b32.xlu0 %v526, 96
  %v568 = vpop.permute.xlu0 %567
  %v576 = vsel %vm319, %v556, 0.0
  %577 = vadd.xlane.f32.xlu0 %v576
  %v578 = vpop.xlane.xlu0 %577
  %v579 = vsel %vm319, %v558, 0.0
  %580 = vadd.xlane.f32.xlu0 %v579
  %v581 = vpop.xlane.xlu0 %580
  %v582 = vsel %vm319, %v560, 0.0
  %583 = vadd.xlane.f32.xlu0 %v582
  %v584 = vpop.xlane.xlu0 %583
  %v585 = vsel %vm319, %v562, 0.0
  %586 = vadd.xlane.f32.xlu0 %v585
  %v587 = vpop.xlane.xlu0 %586
  %v588 = vsel %vm319, %v564, 0.0
  %589 = vadd.xlane.f32.xlu0 %v588
  %v590 = vpop.xlane.xlu0 %589
  %v591 = vsel %vm319, %v566, 0.0
  %592 = vadd.xlane.f32.xlu0 %v591
  %v593 = vpop.xlane.xlu0 %592
  %v594 = vsel %vm319, %v568, 0.0
  %595 = vadd.xlane.f32.xlu0 %v594
  %v596 = vpop.xlane.xlu0 %595
  %vm597 = vcmask 7168
  %v598 = vsel %vm597, %v529, %v578
  %v599 = vsel %vm597, %v532, %v581
  %v600 = vsel %vm597, %v535, %v584
  %v601 = vsel %vm597, %v538, %v587
  %v602 = vsel %vm597, %v541, %v590
  %v603 = vsel %vm597, %v544, %v593
  %v604 = vsel %vm597, %v547, %v596
  %v605 = vld [vmem:[%s12] sm:$0x1]
  %v607 = vlaneseq
  %v608 = vshrl.u32 %v607, 7
  %v609 = vsub.s32 0, %v608
  %v610 = vrot.slane %v605, %v609
  %v612 = vadd.f32 %v598, %v610
  %v613 = vadd.f32 %v599, %v610
  %v614 = vadd.f32 %v600, %v610
  %v615 = vadd.f32 %v601, %v610
  %v616 = vadd.f32 %v602, %v610
  %v617 = vadd.f32 %v603, %v610
  %v618 = vadd.f32 %v604, %v610
  %vm619 = vcmask 15360
  %620 = vst.msk [vmem:[%s13] sm:$0xff] %vm619, %v612
  %621 = vst.msk [vmem:[%s13 + $0x8] sm:$0xff] %vm619, %v613
  %622 = vst.msk [vmem:[%s13 + $0x10] sm:$0xff] %vm619, %v614
  %623 = vst.msk [vmem:[%s13 + $0x18] sm:$0xff] %vm619, %v615
  %624 = vst.msk [vmem:[%s13 + $0x20] sm:$0xff] %vm619, %v616
  %625 = vst.msk [vmem:[%s13 + $0x28] sm:$0xff] %vm619, %v617
  %626 = vst.msk [vmem:[%s13 + $0x30] sm:$0xff] %vm619, %v618
  // Predicated region
  $region54: #{tpu_custom_call.1} parent=0 // pred_check
    _
  $region55: #{tpu_custom_call.1} parent=0 // pred_check_branch
    %628 = sbr.rel (0) target = $region57
  $region56: #{tpu_custom_call.1} parent=0 // pred_region
    _
  $region57: #{tpu_custom_call.1} parent=0 // pred_fallthru
    _
  // Predicated region
  $region58: #{tpu_custom_call.1} parent=0 // pred_check
    _
  $region59: #{tpu_custom_call.1} parent=0 // pred_check_branch
    %630 = sbr.rel (0) target = $region61
  $region60: #{tpu_custom_call.1} parent=0 // pred_region
    _
  $region61: #{tpu_custom_call.1} parent=0 // pred_fallthru
    _

</llo_original>
